<compile_context>
chip_gen: v6e
topology: v6e:2x2x1
jax: 0.10.0
libtpu: 0.0.40
codegen_flags: <defaults>
</compile_context>

<pallas_src>
import functools

import jax
import jax.numpy as jnp
from jax.experimental import pallas as pl
from jax.experimental.pallas import tpu as pltpu


def _se_kernel(x_ref, w1_ref, b1_ref, w2t_ref, b2_ref, o_ref):
    """x_ref/o_ref: (Bt, C, HW).  w1: (C, Cr)  b1: (1, Cr)  w2t: (C, Cr)  b2: (C, 1)."""
    bt = x_ref.shape[0]
    inv_hw = 1.0 / x_ref.shape[-1]

    w1 = w1_ref[...].astype(jnp.float32)    # (C, Cr)
    w2t = w2t_ref[...].astype(jnp.float32)  # (C, Cr)  (= W2 transposed)
    b1 = b1_ref[...].astype(jnp.float32)    # (1, Cr)
    b2 = b2_ref[...].astype(jnp.float32)    # (C, 1)

    # Bt is small (<= 8): static unroll over the packed batch elements.
    for i in range(bt):
        x = x_ref[i]                                   # (C, HW), native dtype
        xf = x.astype(jnp.float32)

        # squeeze: global average pool over spatial = lane reduction -> (C, 1)
        p = jnp.sum(xf, axis=-1, keepdims=True) * inv_hw

        # fc1 + ReLU:  h[r] = relu(b1[r] + sum_c w1[c,r] * p[c])
        #   broadcast (C,1) over lanes, then sublane reduce -> (1, Cr)
        h = jnp.maximum(jnp.sum(w1 * p, axis=0, keepdims=True) + b1, 0.0)

        # fc2 + sigmoid:  s[c] = sigmoid(b2[c] + sum_r w2t[c,r] * h[r])
        #   broadcast (1,Cr) over sublanes, then lane reduce -> (C, 1)
        s = jax.nn.sigmoid(jnp.sum(w2t * h, axis=-1, keepdims=True) + b2)

        # scale: per-channel gate broadcast across the HW lane axis
        o_ref[i] = x * s.astype(x.dtype)


@functools.partial(jax.jit, static_argnames=("multiply",))
def attention_layer(x_nchw, w1, b1, w2, b2, multiply=True):
    """x_nchw: (B, C, H, W).  w1: (C, C//r), b1: (C//r,), w2: (C//r, C), b2: (C,)."""
    B, C, H, W = x_nchw.shape
    HW = H * W
    Cr = w1.shape[1]

    if not multiply:
        # multiply=False returns just the gate (B, C, 1, 1): tiny compute, no
        # point launching a kernel for it.
        y = jnp.mean(x_nchw, axis=(2, 3))
        h = jnp.maximum(y @ w1 + b1, 0.0)
        s = jax.nn.sigmoid(h @ w2 + b2)
        return s.reshape(B, C, 1, 1)

    # Free reshape: keep native NCHW layout (C -> sublanes, HW -> lanes).
    xr = x_nchw.reshape(B, C, HW)
    w2t = jnp.transpose(w2)          # (C, Cr): tiny, one-off
    b1_r = b1.reshape(1, Cr)
    b2_c = b2.reshape(C, 1)

    # --- batch tile selection under an explicit VMEM budget -----------------
    dtype_bytes = jnp.dtype(x_nchw.dtype).itemsize
    per_batch = C * HW * dtype_bytes                 # one (1, C, HW) buffer
    io_budget = 24 * 1024 * 1024                     # double-buffered in + out
    bt = max(1, min(B, 8, io_budget // max(1, 4 * per_batch)))
    while B % bt != 0:                               # keep the grid exact
        bt -= 1
    # TODO(synk): if a single (1, C, HW) block exceeds the VMEM budget, fall
    # back to a two-kernel scheme (tiled pool with an 'arbitrary' reduction
    # axis + separate scale kernel) instead of one fused block.

    weight_bytes = 4 * (w1.size + w2.size + b1.size + b2.size)
    vmem_need = 4 * bt * per_batch + 2 * weight_bytes + (2 << 20)
    vmem_limit = int(min(max(vmem_need, 32 * 1024 * 1024), 128 * 1024 * 1024))

    out = pl.pallas_call(
        _se_kernel,
        out_shape=jax.ShapeDtypeStruct((B, C, HW), x_nchw.dtype),
        grid_spec=pltpu.PrefetchScalarGridSpec(
            num_scalar_prefetch=0,
            grid=(B // bt,),
            in_specs=[
                pl.BlockSpec((bt, C, HW), lambda b: (b, 0, 0)),
                pl.BlockSpec((C, Cr), lambda b: (0, 0)),
                pl.BlockSpec((1, Cr), lambda b: (0, 0)),
                pl.BlockSpec((C, Cr), lambda b: (0, 0)),
                pl.BlockSpec((C, 1), lambda b: (0, 0)),
            ],
            out_specs=pl.BlockSpec((bt, C, HW), lambda b: (b, 0, 0)),
        ),
        compiler_params=pltpu.CompilerParams(
            dimension_semantics=("parallel",),
            vmem_limit_bytes=vmem_limit,
        ),
    )(xr, w1, b1_r, w2t, b2_c)

    # Free reshape back to NCHW (no transpose anywhere).
    return out.reshape(B, C, H, W)


def _reference(x_nchw, w1, b1, w2, b2):
    B, C, H, W = x_nchw.shape
    y = jnp.mean(x_nchw, axis=(2, 3))                # (B, C)
    h = jnp.maximum(y @ w1 + b1, 0.0)
    s = jax.nn.sigmoid(h @ w2 + b2)
    return x_nchw * s.reshape(B, C, 1, 1)


if __name__ == "__main__":
    # channel // reduction must be >= 1: channel=128, reduction=64 -> hidden=2.
    B, C, H, W = 2, 128, 16, 16
    reduction = 64
    Cr = C // reduction

    key = jax.random.PRNGKey(0)
    kx, k1, k2, k3, k4 = jax.random.split(key, 5)
    x = jax.random.normal(kx, (B, C, H, W), dtype=jnp.float32)
    # Linear weight layout used here: (in, out).
    w1 = jax.random.normal(k1, (C, Cr), dtype=jnp.float32) * 0.05
    b1 = jax.random.normal(k2, (Cr,), dtype=jnp.float32) * 0.05
    w2 = jax.random.normal(k3, (Cr, C), dtype=jnp.float32) * 0.05
    b2 = jax.random.normal(k4, (C,), dtype=jnp.float32) * 0.05

    out = attention_layer(x, w1, b1, w2, b2, multiply=True)
    out = jax.block_until_ready(out)

    ref = _reference(x, w1, b1, w2, b2)
    assert out.shape == (B, C, H, W)
    assert jnp.allclose(out, ref, atol=1e-5, rtol=1e-5), "mismatch vs reference"

    # gate-only branch (multiply=False) sanity check
    gate = jax.block_until_ready(attention_layer(x, w1, b1, w2, b2, multiply=False))
    assert gate.shape == (B, C, 1, 1)

    print("KERNEL_OK")
</pallas_src>

<mosaic_0001>
module attributes {stable_mosaic.version = 11 : i64} {
  func.func @_se_kernel(%arg0: i32, %arg1: memref<2x128x256xf32, #tpu.memory_space<vmem>>, %arg2: memref<128x2xf32, #tpu.memory_space<vmem>>, %arg3: memref<1x2xf32, #tpu.memory_space<vmem>>, %arg4: memref<128x2xf32, #tpu.memory_space<vmem>>, %arg5: memref<128x1xf32, #tpu.memory_space<vmem>>, %arg6: memref<2x128x256xf32, #tpu.memory_space<vmem>>) attributes {dimension_semantics = [#tpu.dimension_semantics<parallel>], iteration_bounds = array<i64: 1>, scalar_prefetch = 0 : i64, scratch_operands = 0 : i64, tpu.core_type = #tpu.core_type<tc>, window_params = [{transform_indices = @transform_0, window_bounds = array<i64: 2, 128, 256>}, {pipeline_mode = #tpu.pipeline_mode<synchronous>, transform_indices = @transform_1, window_bounds = array<i64: 128, 2>}, {pipeline_mode = #tpu.pipeline_mode<synchronous>, transform_indices = @transform_2, window_bounds = array<i64: 1, 2>}, {pipeline_mode = #tpu.pipeline_mode<synchronous>, transform_indices = @transform_3, window_bounds = array<i64: 128, 2>}, {pipeline_mode = #tpu.pipeline_mode<synchronous>, transform_indices = @transform_4, window_bounds = array<i64: 128, 1>}, {transform_indices = @transform_5, window_bounds = array<i64: 2, 128, 256>}]} {
    %c0 = arith.constant 0 : index
    %c0_0 = arith.constant 0 : index
    %0 = vector.load %arg2[%c0, %c0_0] : memref<128x2xf32, #tpu.memory_space<vmem>>, vector<128x2xf32>
    %c0_1 = arith.constant 0 : index
    %c0_2 = arith.constant 0 : index
    %1 = vector.load %arg4[%c0_1, %c0_2] : memref<128x2xf32, #tpu.memory_space<vmem>>, vector<128x2xf32>
    %c0_3 = arith.constant 0 : index
    %c0_4 = arith.constant 0 : index
    %2 = vector.load %arg3[%c0_3, %c0_4] : memref<1x2xf32, #tpu.memory_space<vmem>>, vector<1x2xf32>
    %c0_5 = arith.constant 0 : index
    %c0_6 = arith.constant 0 : index
    %3 = vector.load %arg5[%c0_5, %c0_6] : memref<128x1xf32, #tpu.memory_space<vmem>>, vector<128x1xf32>
    %c0_7 = arith.constant 0 : index
    %c0_8 = arith.constant 0 : index
    %c0_9 = arith.constant 0 : index
    %4 = vector.load %arg1[%c0_7, %c0_8, %c0_9] : memref<2x128x256xf32, #tpu.memory_space<vmem>>, vector<1x128x256xf32>
    %5 = vector.shape_cast %4 : vector<1x128x256xf32> to vector<128x256xf32>
    %cst = arith.constant dense<0.000000e+00> : vector<128xf32>
    %6 = vector.multi_reduction <add>, %5, %cst [1] : vector<128x256xf32> to vector<128xf32>
    %7 = vector.shape_cast %6 : vector<128xf32> to vector<128x1xf32>
    %cst_10 = arith.constant 3.906250e-03 : f32
    %8 = vector.broadcast %cst_10 : f32 to vector<128x1xf32>
    %9 = arith.mulf %7, %8 : vector<128x1xf32>
    %10 = vector.broadcast %9 : vector<128x1xf32> to vector<128x2xf32>
    %11 = arith.mulf %0, %10 : vector<128x2xf32>
    %cst_11 = arith.constant dense<0.000000e+00> : vector<2xf32>
    %12 = vector.multi_reduction <add>, %11, %cst_11 [0] : vector<128x2xf32> to vector<2xf32>
    %13 = vector.shape_cast %12 : vector<2xf32> to vector<1x2xf32>
    %14 = arith.addf %13, %2 : vector<1x2xf32>
    %cst_12 = arith.constant 0.000000e+00 : f32
    %15 = vector.broadcast %cst_12 : f32 to vector<1x2xf32>
    %16 = arith.maximumf %14, %15 : vector<1x2xf32>
    %17 = vector.broadcast %16 : vector<1x2xf32> to vector<128x2xf32>
    %18 = arith.mulf %1, %17 : vector<128x2xf32>
    %cst_13 = arith.constant dense<0.000000e+00> : vector<128xf32>
    %19 = vector.multi_reduction <add>, %18, %cst_13 [1] : vector<128x2xf32> to vector<128xf32>
    %20 = vector.shape_cast %19 : vector<128xf32> to vector<128x1xf32>
    %21 = arith.addf %20, %3 : vector<128x1xf32>
    %22 = arith.negf %21 : vector<128x1xf32>
    %23 = math.exp %22 : vector<128x1xf32>
    %cst_14 = arith.constant 1.000000e+00 : f32
    %24 = vector.broadcast %cst_14 : f32 to vector<128x1xf32>
    %25 = arith.addf %24, %23 : vector<128x1xf32>
    %26 = arith.divf %24, %25 : vector<128x1xf32>
    %27 = vector.broadcast %26 : vector<128x1xf32> to vector<128x256xf32>
    %28 = arith.mulf %5, %27 : vector<128x256xf32>
    %c0_15 = arith.constant 0 : index
    %c0_16 = arith.constant 0 : index
    %c0_17 = arith.constant 0 : index
    %29 = vector.load %arg6[%c0_15, %c0_16, %c0_17] : memref<2x128x256xf32, #tpu.memory_space<vmem>>, vector<1x128x256xf32>
    %30 = vector.shape_cast %29 : vector<1x128x256xf32> to vector<128x256xf32>
    %31 = vector.shape_cast %28 : vector<128x256xf32> to vector<1x128x256xf32>
    tpu.vector_store %arg6[%c0_15, %c0_16, %c0_17], %31 {strides = array<i32>} : memref<2x128x256xf32, #tpu.memory_space<vmem>>, vector<1x128x256xf32>,
    %c1 = arith.constant 1 : index
    %c0_18 = arith.constant 0 : index
    %c0_19 = arith.constant 0 : index
    %32 = vector.load %arg1[%c1, %c0_18, %c0_19] : memref<2x128x256xf32, #tpu.memory_space<vmem>>, vector<1x128x256xf32>
    %33 = vector.shape_cast %32 : vector<1x128x256xf32> to vector<128x256xf32>
    %cst_20 = arith.constant dense<0.000000e+00> : vector<128xf32>
    %34 = vector.multi_reduction <add>, %33, %cst_20 [1] : vector<128x256xf32> to vector<128xf32>
    %35 = vector.shape_cast %34 : vector<128xf32> to vector<128x1xf32>
    %cst_21 = arith.constant 3.906250e-03 : f32
    %36 = vector.broadcast %cst_21 : f32 to vector<128x1xf32>
    %37 = arith.mulf %35, %36 : vector<128x1xf32>
    %38 = vector.broadcast %37 : vector<128x1xf32> to vector<128x2xf32>
    %39 = arith.mulf %0, %38 : vector<128x2xf32>
    %cst_22 = arith.constant dense<0.000000e+00> : vector<2xf32>
    %40 = vector.multi_reduction <add>, %39, %cst_22 [0] : vector<128x2xf32> to vector<2xf32>
    %41 = vector.shape_cast %40 : vector<2xf32> to vector<1x2xf32>
    %42 = arith.addf %41, %2 : vector<1x2xf32>
    %cst_23 = arith.constant 0.000000e+00 : f32
    %43 = vector.broadcast %cst_23 : f32 to vector<1x2xf32>
    %44 = arith.maximumf %42, %43 : vector<1x2xf32>
    %45 = vector.broadcast %44 : vector<1x2xf32> to vector<128x2xf32>
    %46 = arith.mulf %1, %45 : vector<128x2xf32>
    %cst_24 = arith.constant dense<0.000000e+00> : vector<128xf32>
    %47 = vector.multi_reduction <add>, %46, %cst_24 [1] : vector<128x2xf32> to vector<128xf32>
    %48 = vector.shape_cast %47 : vector<128xf32> to vector<128x1xf32>
    %49 = arith.addf %48, %3 : vector<128x1xf32>
    %50 = arith.negf %49 : vector<128x1xf32>
    %51 = math.exp %50 : vector<128x1xf32>
    %cst_25 = arith.constant 1.000000e+00 : f32
    %52 = vector.broadcast %cst_25 : f32 to vector<128x1xf32>
    %53 = arith.addf %52, %51 : vector<128x1xf32>
    %54 = arith.divf %52, %53 : vector<128x1xf32>
    %55 = vector.broadcast %54 : vector<128x1xf32> to vector<128x256xf32>
    %56 = arith.mulf %33, %55 : vector<128x256xf32>
    %c1_26 = arith.constant 1 : index
    %c0_27 = arith.constant 0 : index
    %c0_28 = arith.constant 0 : index
    %57 = vector.load %arg6[%c1_26, %c0_27, %c0_28] : memref<2x128x256xf32, #tpu.memory_space<vmem>>, vector<1x128x256xf32>
    %58 = vector.shape_cast %57 : vector<1x128x256xf32> to vector<128x256xf32>
    %59 = vector.shape_cast %56 : vector<128x256xf32> to vector<1x128x256xf32>
    tpu.vector_store %arg6[%c1_26, %c0_27, %c0_28], %59 {strides = array<i32>} : memref<2x128x256xf32, #tpu.memory_space<vmem>>, vector<1x128x256xf32>,
    return
  }
  func.func @transform_0(%arg0: i32) -> (i32, i32, i32) {
    %c0_i32 = arith.constant 0 : i32
    %c0_i32_0 = arith.constant 0 : i32
    %c0_i32_1 = arith.constant 0 : i32
    return %arg0, %c0_i32, %c0_i32_0 : i32, i32, i32
  }
  func.func @transform_1(%arg0: i32) -> (i32, i32) {
    %c0_i32 = arith.constant 0 : i32
    %c0_i32_0 = arith.constant 0 : i32
    %c0_i32_1 = arith.constant 0 : i32
    return %c0_i32, %c0_i32_0 : i32, i32
  }
  func.func @transform_2(%arg0: i32) -> (i32, i32) {
    %c0_i32 = arith.constant 0 : i32
    %c0_i32_0 = arith.constant 0 : i32
    %c0_i32_1 = arith.constant 0 : i32
    return %c0_i32, %c0_i32_0 : i32, i32
  }
  func.func @transform_3(%arg0: i32) -> (i32, i32) {
    %c0_i32 = arith.constant 0 : i32
    %c0_i32_0 = arith.constant 0 : i32
    %c0_i32_1 = arith.constant 0 : i32
    return %c0_i32, %c0_i32_0 : i32, i32
  }
  func.func @transform_4(%arg0: i32) -> (i32, i32) {
    %c0_i32 = arith.constant 0 : i32
    %c0_i32_0 = arith.constant 0 : i32
    %c0_i32_1 = arith.constant 0 : i32
    return %c0_i32, %c0_i32_0 : i32, i32
  }
  func.func @transform_5(%arg0: i32) -> (i32, i32, i32) {
    %c0_i32 = arith.constant 0 : i32
    %c0_i32_0 = arith.constant 0 : i32
    %c0_i32_1 = arith.constant 0 : i32
    return %arg0, %c0_i32, %c0_i32_0 : i32, i32, i32
  }
}

</mosaic_0001>

<llo_original>
// kernel: attention_layer.1
$region0: #{attention_layer.1}
  #allocation0 [shape = 'u32[]', space=smem, size = 0x4, offset = 0x4, fixed_abs, tag = 'smem constant byte address 0x4 - core index']
  #allocation1 [shape = 'u32[144,128]{1,0:T(1,128)}', space=vmem, size = 0x12000, scoped, tag = 'internal scratch']
  %s0 = inlined_call_operand.vmem [shape: f32[2,128,256], index: 0, kind: input, shape index: {}]
  %s1 = inlined_call_operand.vmem [shape: f32[128,2], index: 1, kind: input, shape index: {}]
  %s2 = inlined_call_operand.vmem [shape: f32[1,2], index: 2, kind: input, shape index: {}]
  %s3 = inlined_call_operand.vmem [shape: f32[128,2], index: 3, kind: input, shape index: {}]
  %s4 = inlined_call_operand.vmem [shape: f32[128,1], index: 4, kind: input, shape index: {}]
  %s5 = inlined_call_operand.vmem [shape: f32[2,128,256], index: 5, kind: output, shape index: {}]
  %s6 = sld [smem:[#allocation0]]
  $region30: #{attention_layer.1} parent=0
    _
  %s8 = ssub.s32 1, %s6
  %s9 = scalar_select 0, %s8, %s6
  // Predicated region
  $region2: #{attention_layer.1} parent=0 // pred_check
    _
  $region3: #{attention_layer.1} parent=0 // pred_check_branch
    %11 = sbr.rel (0) target = $region5
  $region4: #{attention_layer.1} parent=0 // pred_region
    _
  $region5: #{attention_layer.1} parent=0 // pred_fallthru
    _
  // Predicated region
  $region6: #{attention_layer.1} parent=0 // pred_check
    _
  $region7: #{attention_layer.1} parent=0 // pred_check_branch
    %13 = sbr.rel (0) target = $region9
  $region8: #{attention_layer.1} parent=0 // pred_region
    _
  $region9: #{attention_layer.1} parent=0 // pred_fallthru
    _
  // Predicated region
  $region10: #{attention_layer.1} parent=0 // pred_check
    _
  $region11: #{attention_layer.1} parent=0 // pred_check_branch
    %15 = sbr.rel (0) target = $region13
  $region12: #{attention_layer.1} parent=0 // pred_region
    _
  $region13: #{attention_layer.1} parent=0 // pred_fallthru
    _
  // Predicated region
  $region14: #{attention_layer.1} parent=0 // pred_check
    _
  $region15: #{attention_layer.1} parent=0 // pred_check_branch
    %17 = sbr.rel (0) target = $region17
  $region16: #{attention_layer.1} parent=0 // pred_region
    _
  $region17: #{attention_layer.1} parent=0 // pred_fallthru
    _
  // Predicated region
  $region18: #{attention_layer.1} parent=0 // pred_check
    _
  $region19: #{attention_layer.1} parent=0 // pred_check_branch
    %19 = sbr.rel (0) target = $region21
  $region20: #{attention_layer.1} parent=0 // pred_region
    _
  $region21: #{attention_layer.1} parent=0 // pred_fallthru
    _
  %v20 = vld [vmem:[%s1] sm:$0xff]
  %v21 = vld [vmem:[%s1 + $0x8] sm:$0xff]
  %v22 = vld [vmem:[%s1 + $0x10] sm:$0xff]
  %v23 = vld [vmem:[%s1 + $0x18] sm:$0xff]
  %v24 = vld [vmem:[%s1 + $0x20] sm:$0xff]
  %v25 = vld [vmem:[%s1 + $0x28] sm:$0xff]
  %v26 = vld [vmem:[%s1 + $0x30] sm:$0xff]
  %v27 = vld [vmem:[%s1 + $0x38] sm:$0xff]
  %v28 = vld [vmem:[%s1 + $0x40] sm:$0xff]
  %v29 = vld [vmem:[%s1 + $0x48] sm:$0xff]
  %v30 = vld [vmem:[%s1 + $0x50] sm:$0xff]
  %v31 = vld [vmem:[%s1 + $0x58] sm:$0xff]
  %v32 = vld [vmem:[%s1 + $0x60] sm:$0xff]
  %v33 = vld [vmem:[%s1 + $0x68] sm:$0xff]
  %v34 = vld [vmem:[%s1 + $0x70] sm:$0xff]
  %v35 = vld [vmem:[%s1 + $0x78] sm:$0xff]
  %v36 = vld [vmem:[%s3] sm:$0xff]
  %v37 = vld [vmem:[%s3 + $0x8] sm:$0xff]
  %v38 = vld [vmem:[%s3 + $0x10] sm:$0xff]
  %v39 = vld [vmem:[%s3 + $0x18] sm:$0xff]
  %v40 = vld [vmem:[%s3 + $0x20] sm:$0xff]
  %v41 = vld [vmem:[%s3 + $0x28] sm:$0xff]
  %v42 = vld [vmem:[%s3 + $0x30] sm:$0xff]
  %v43 = vld [vmem:[%s3 + $0x38] sm:$0xff]
  %v44 = vld [vmem:[%s3 + $0x40] sm:$0xff]
  %v45 = vld [vmem:[%s3 + $0x48] sm:$0xff]
  %v46 = vld [vmem:[%s3 + $0x50] sm:$0xff]
  %v47 = vld [vmem:[%s3 + $0x58] sm:$0xff]
  %v48 = vld [vmem:[%s3 + $0x60] sm:$0xff]
  %v49 = vld [vmem:[%s3 + $0x68] sm:$0xff]
  %v50 = vld [vmem:[%s3 + $0x70] sm:$0xff]
  %v51 = vld [vmem:[%s3 + $0x78] sm:$0xff]
  %v52 = vld [vmem:[%s2] sm:$0x1]
  %v53 = vld [vmem:[%s4] sm:$0xff]
  %v54 = vld [vmem:[%s4 + $0x8] sm:$0xff]
  %v55 = vld [vmem:[%s4 + $0x10] sm:$0xff]
  %v56 = vld [vmem:[%s4 + $0x18] sm:$0xff]
  %v57 = vld [vmem:[%s4 + $0x20] sm:$0xff]
  %v58 = vld [vmem:[%s4 + $0x28] sm:$0xff]
  %v59 = vld [vmem:[%s4 + $0x30] sm:$0xff]
  %v60 = vld [vmem:[%s4 + $0x38] sm:$0xff]
  %v61 = vld [vmem:[%s4 + $0x40] sm:$0xff]
  %v62 = vld [vmem:[%s4 + $0x48] sm:$0xff]
  %v63 = vld [vmem:[%s4 + $0x50] sm:$0xff]
  %v64 = vld [vmem:[%s4 + $0x58] sm:$0xff]
  %v65 = vld [vmem:[%s4 + $0x60] sm:$0xff]
  %v66 = vld [vmem:[%s4 + $0x68] sm:$0xff]
  %v67 = vld [vmem:[%s4 + $0x70] sm:$0xff]
  %v68 = vld [vmem:[%s4 + $0x78] sm:$0xff]
  %v69 = vld [vmem:[%s0] sm:$0xff]
  %v70 = vld [vmem:[%s0 + $0x8] sm:$0xff]
  %v71 = vld [vmem:[%s0 + $0x10] sm:$0xff]
  %v72 = vld [vmem:[%s0 + $0x18] sm:$0xff]
  %v73 = vld [vmem:[%s0 + $0x20] sm:$0xff]
  %v74 = vld [vmem:[%s0 + $0x28] sm:$0xff]
  %v75 = vld [vmem:[%s0 + $0x30] sm:$0xff]
  %v76 = vld [vmem:[%s0 + $0x38] sm:$0xff]
  %v77 = vld [vmem:[%s0 + $0x40] sm:$0xff]
  %v78 = vld [vmem:[%s0 + $0x48] sm:$0xff]
  %v79 = vld [vmem:[%s0 + $0x50] sm:$0xff]
  %v80 = vld [vmem:[%s0 + $0x58] sm:$0xff]
  %v81 = vld [vmem:[%s0 + $0x60] sm:$0xff]
  %v82 = vld [vmem:[%s0 + $0x68] sm:$0xff]
  %v83 = vld [vmem:[%s0 + $0x70] sm:$0xff]
  %v84 = vld [vmem:[%s0 + $0x78] sm:$0xff]
  %v85 = vld [vmem:[%s0 + $0x80] sm:$0xff]
  %v86 = vld [vmem:[%s0 + $0x88] sm:$0xff]
  %v87 = vld [vmem:[%s0 + $0x90] sm:$0xff]
  %v88 = vld [vmem:[%s0 + $0x98] sm:$0xff]
  %v89 = vld [vmem:[%s0 + $0xa0] sm:$0xff]
  %v90 = vld [vmem:[%s0 + $0xa8] sm:$0xff]
  %v91 = vld [vmem:[%s0 + $0xb0] sm:$0xff]
  %v92 = vld [vmem:[%s0 + $0xb8] sm:$0xff]
  %v93 = vld [vmem:[%s0 + $0xc0] sm:$0xff]
  %v94 = vld [vmem:[%s0 + $0xc8] sm:$0xff]
  %v95 = vld [vmem:[%s0 + $0xd0] sm:$0xff]
  %v96 = vld [vmem:[%s0 + $0xd8] sm:$0xff]
  %v97 = vld [vmem:[%s0 + $0xe0] sm:$0xff]
  %v98 = vld [vmem:[%s0 + $0xe8] sm:$0xff]
  %v99 = vld [vmem:[%s0 + $0xf0] sm:$0xff]
  %v100 = vld [vmem:[%s0 + $0xf8] sm:$0xff]
  %v101 = vadd.f32 %v69, %v70
  %102 = vadd.xlane.f32.xlu0 %v101
  %v103 = vpop.xlane.xlu0 %102
  %v104 = vadd.f32 %v71, %v72
  %105 = vadd.xlane.f32.xlu0 %v104
  %v106 = vpop.xlane.xlu0 %105
  %v107 = vadd.f32 %v73, %v74
  %108 = vadd.xlane.f32.xlu0 %v107
  %v109 = vpop.xlane.xlu0 %108
  %v110 = vadd.f32 %v75, %v76
  %111 = vadd.xlane.f32.xlu0 %v110
  %v112 = vpop.xlane.xlu0 %111
  %v113 = vadd.f32 %v77, %v78
  %114 = vadd.xlane.f32.xlu0 %v113
  %v115 = vpop.xlane.xlu0 %114
  %v116 = vadd.f32 %v79, %v80
  %117 = vadd.xlane.f32.xlu0 %v116
  %v118 = vpop.xlane.xlu0 %117
  %v119 = vadd.f32 %v81, %v82
  %120 = vadd.xlane.f32.xlu0 %v119
  %v121 = vpop.xlane.xlu0 %120
  %v122 = vadd.f32 %v83, %v84
  %123 = vadd.xlane.f32.xlu0 %v122
  %v124 = vpop.xlane.xlu0 %123
  %v125 = vadd.f32 %v85, %v86
  %126 = vadd.xlane.f32.xlu0 %v125
  %v127 = vpop.xlane.xlu0 %126
  %v128 = vadd.f32 %v87, %v88
  %129 = vadd.xlane.f32.xlu0 %v128
  %v130 = vpop.xlane.xlu0 %129
  %v131 = vadd.f32 %v89, %v90
  %132 = vadd.xlane.f32.xlu0 %v131
  %v133 = vpop.xlane.xlu0 %132
  %v134 = vadd.f32 %v91, %v92
  %135 = vadd.xlane.f32.xlu0 %v134
  %v136 = vpop.xlane.xlu0 %135
  %v137 = vadd.f32 %v93, %v94
  %138 = vadd.xlane.f32.xlu0 %v137
  %v139 = vpop.xlane.xlu0 %138
  %v140 = vadd.f32 %v95, %v96
  %141 = vadd.xlane.f32.xlu0 %v140
  %v142 = vpop.xlane.xlu0 %141
  %v143 = vadd.f32 %v97, %v98
  %144 = vadd.xlane.f32.xlu0 %v143
  %v145 = vpop.xlane.xlu0 %144
  %v146 = vadd.f32 %v99, %v100
  %147 = vadd.xlane.f32.xlu0 %v146
  %v148 = vpop.xlane.xlu0 %147
  %v149 = vmul.f32 %v103, 0.00390625
  %v150 = vmul.f32 %v106, 0.00390625
  %v151 = vmul.f32 %v109, 0.00390625
  %v152 = vmul.f32 %v112, 0.00390625
  %v153 = vmul.f32 %v115, 0.00390625
  %v154 = vmul.f32 %v118, 0.00390625
  %v155 = vmul.f32 %v121, 0.00390625
  %v156 = vmul.f32 %v124, 0.00390625
  %v157 = vmul.f32 %v127, 0.00390625
  %v158 = vmul.f32 %v130, 0.00390625
  %v159 = vmul.f32 %v133, 0.00390625
  %v160 = vmul.f32 %v136, 0.00390625
  %v161 = vmul.f32 %v139, 0.00390625
  %v162 = vmul.f32 %v142, 0.00390625
  %v163 = vmul.f32 %v145, 0.00390625
  %v164 = vmul.f32 %v148, 0.00390625
  %v165 = vmul.f32 %v20, %v149
  %v166 = vmul.f32 %v21, %v150
  %v167 = vmul.f32 %v22, %v151
  %v168 = vmul.f32 %v23, %v152
  %v169 = vmul.f32 %v24, %v153
  %v170 = vmul.f32 %v25, %v154
  %v171 = vmul.f32 %v26, %v155
  %v172 = vmul.f32 %v27, %v156
  %v173 = vmul.f32 %v28, %v157
  %v174 = vmul.f32 %v29, %v158
  %v175 = vmul.f32 %v30, %v159
  %v176 = vmul.f32 %v31, %v160
  %v177 = vmul.f32 %v32, %v161
  %v178 = vmul.f32 %v33, %v162
  %v179 = vmul.f32 %v34, %v163
  %v180 = vmul.f32 %v35, %v164
  %vm181 = vcmask 15360
  %v182 = vsel %vm181, %v165, 0.0
  %v183 = vsel %vm181, %v166, 0.0
  %v184 = vadd.f32 %v182, %v183
  %v185 = vsel %vm181, %v167, 0.0
  %v186 = vadd.f32 %v184, %v185
  %v187 = vsel %vm181, %v168, 0.0
  %v188 = vadd.f32 %v186, %v187
  %v189 = vsel %vm181, %v169, 0.0
  %v190 = vadd.f32 %v188, %v189
  %v191 = vsel %vm181, %v170, 0.0
  %v192 = vadd.f32 %v190, %v191
  %v193 = vsel %vm181, %v171, 0.0
  %v194 = vadd.f32 %v192, %v193
  %v195 = vsel %vm181, %v172, 0.0
  %v196 = vadd.f32 %v194, %v195
  %v197 = vsel %vm181, %v173, 0.0
  %v198 = vadd.f32 %v196, %v197
  %v199 = vsel %vm181, %v174, 0.0
  %v200 = vadd.f32 %v198, %v199
  %v201 = vsel %vm181, %v175, 0.0
  %v202 = vadd.f32 %v200, %v201
  %v203 = vsel %vm181, %v176, 0.0
  %v204 = vadd.f32 %v202, %v203
  %v205 = vsel %vm181, %v177, 0.0
  %v206 = vadd.f32 %v204, %v205
  %v207 = vsel %vm181, %v178, 0.0
  %v208 = vadd.f32 %v206, %v207
  %v209 = vsel %vm181, %v179, 0.0
  %v210 = vadd.f32 %v208, %v209
  %v211 = vsel %vm181, %v180, 0.0
  %v212 = vadd.f32 %v210, %v211
  %v213 = vrot.slane %v212, 4
  %v214 = vadd.f32 %v212, %v213
  %v215 = vrot.slane %v214, 2
  %v216 = vadd.f32 %v214, %v215
  %v217 = vrot.slane %v216, 1
  %v218 = vadd.f32 %v216, %v217
  %v219 = vadd.f32 %v218, %v52
  %v220 = vmax.f32 %v219, 0.0
  %v221 = vlaneseq
  %v222 = vshrl.u32 %v221, 7
  %v223 = vsub.s32 0, %v222
  %v224 = vrot.slane %v220, %v223
  %v225 = vmul.f32 %v36, %v224
  %v226 = vmul.f32 %v37, %v224
  %v227 = vmul.f32 %v38, %v224
  %v228 = vmul.f32 %v39, %v224
  %v229 = vmul.f32 %v40, %v224
  %v230 = vmul.f32 %v41, %v224
  %v231 = vmul.f32 %v42, %v224
  %v232 = vmul.f32 %v43, %v224
  %v233 = vmul.f32 %v44, %v224
  %v234 = vmul.f32 %v45, %v224
  %v235 = vmul.f32 %v46, %v224
  %v236 = vmul.f32 %v47, %v224
  %v237 = vmul.f32 %v48, %v224
  %v238 = vmul.f32 %v49, %v224
  %v239 = vmul.f32 %v50, %v224
  %v240 = vmul.f32 %v51, %v224
  %v241 = vsel %vm181, %v225, 0.0
  %242 = vadd.xlane.f32.xlu0 %v241
  %v243 = vpop.xlane.xlu0 %242
  %v244 = vsel %vm181, %v226, 0.0
  %245 = vadd.xlane.f32.xlu0 %v244
  %v246 = vpop.xlane.xlu0 %245
  %v247 = vsel %vm181, %v227, 0.0
  %248 = vadd.xlane.f32.xlu0 %v247
  %v249 = vpop.xlane.xlu0 %248
  %v250 = vsel %vm181, %v228, 0.0
  %251 = vadd.xlane.f32.xlu0 %v250
  %v252 = vpop.xlane.xlu0 %251
  %v253 = vsel %vm181, %v229, 0.0
  %254 = vadd.xlane.f32.xlu0 %v253
  %v255 = vpop.xlane.xlu0 %254
  %v256 = vsel %vm181, %v230, 0.0
  %257 = vadd.xlane.f32.xlu0 %v256
  %v258 = vpop.xlane.xlu0 %257
  %v259 = vsel %vm181, %v231, 0.0
  %260 = vadd.xlane.f32.xlu0 %v259
  %v261 = vpop.xlane.xlu0 %260
  %v262 = vsel %vm181, %v232, 0.0
  %263 = vadd.xlane.f32.xlu0 %v262
  %v264 = vpop.xlane.xlu0 %263
  %v265 = vsel %vm181, %v233, 0.0
  %266 = vadd.xlane.f32.xlu0 %v265
  %v267 = vpop.xlane.xlu0 %266
  %v268 = vsel %vm181, %v234, 0.0
  %269 = vadd.xlane.f32.xlu0 %v268
  %v270 = vpop.xlane.xlu0 %269
  %v271 = vsel %vm181, %v235, 0.0
  %272 = vadd.xlane.f32.xlu0 %v271
  %v273 = vpop.xlane.xlu0 %272
  %v274 = vsel %vm181, %v236, 0.0
  %275 = vadd.xlane.f32.xlu0 %v274
  %v276 = vpop.xlane.xlu0 %275
  %v277 = vsel %vm181, %v237, 0.0
  %278 = vadd.xlane.f32.xlu0 %v277
  %v279 = vpop.xlane.xlu0 %278
  %v280 = vsel %vm181, %v238, 0.0
  %281 = vadd.xlane.f32.xlu0 %v280
  %v282 = vpop.xlane.xlu0 %281
  %v283 = vsel %vm181, %v239, 0.0
  %284 = vadd.xlane.f32.xlu0 %v283
  %v285 = vpop.xlane.xlu0 %284
  %v286 = vsel %vm181, %v240, 0.0
  %287 = vadd.xlane.f32.xlu0 %v286
  %v288 = vpop.xlane.xlu0 %287
  %v289 = vadd.f32 %v243, %v53
  %v290 = vadd.f32 %v246, %v54
  %v291 = vadd.f32 %v249, %v55
  %v292 = vadd.f32 %v252, %v56
  %v293 = vadd.f32 %v255, %v57
  %v294 = vadd.f32 %v258, %v58
  %v295 = vadd.f32 %v261, %v59
  %v296 = vadd.f32 %v264, %v60
  %v297 = vadd.f32 %v267, %v61
  %v298 = vadd.f32 %v270, %v62
  %v299 = vadd.f32 %v273, %v63
  %v300 = vadd.f32 %v276, %v64
  %v301 = vadd.f32 %v279, %v65
  %v302 = vadd.f32 %v282, %v66
  %v303 = vadd.f32 %v285, %v67
  %v304 = vadd.f32 %v288, %v68
  %v305 = vxor.u32 %v289, 2147483648
  %v306 = vxor.u32 %v290, 2147483648
  %v307 = vxor.u32 %v291, 2147483648
  %v308 = vxor.u32 %v292, 2147483648
  %v309 = vxor.u32 %v293, 2147483648
  %v310 = vxor.u32 %v294, 2147483648
  %v311 = vxor.u32 %v295, 2147483648
  %v312 = vxor.u32 %v296, 2147483648
  %v313 = vxor.u32 %v297, 2147483648
  %v314 = vxor.u32 %v298, 2147483648
  %v315 = vxor.u32 %v299, 2147483648
  %v316 = vxor.u32 %v300, 2147483648
  %v317 = vxor.u32 %v301, 2147483648
  %v318 = vxor.u32 %v302, 2147483648
  %v319 = vxor.u32 %v303, 2147483648
  %v320 = vxor.u32 %v304, 2147483648
  %v321 = vmul.f32 %v305, 1.442695
  %v322 = vpow.pop %v321
  %v323 = vmul.f32 %v306, 1.442695
  %v324 = vpow.pop %v323
  %v325 = vmul.f32 %v307, 1.442695
  %v326 = vpow.pop %v325
  %v327 = vmul.f32 %v308, 1.442695
  %v328 = vpow.pop %v327
  %v329 = vmul.f32 %v309, 1.442695
  %v330 = vpow.pop %v329
  %v331 = vmul.f32 %v310, 1.442695
  %v332 = vpow.pop %v331
  %v333 = vmul.f32 %v311, 1.442695
  %v334 = vpow.pop %v333
  %v335 = vmul.f32 %v312, 1.442695
  %v336 = vpow.pop %v335
  %v337 = vmul.f32 %v313, 1.442695
  %v338 = vpow.pop %v337
  %v339 = vmul.f32 %v314, 1.442695
  %v340 = vpow.pop %v339
  %v341 = vmul.f32 %v315, 1.442695
  %v342 = vpow.pop %v341
  %v343 = vmul.f32 %v316, 1.442695
  %v344 = vpow.pop %v343
  %v345 = vmul.f32 %v317, 1.442695
  %v346 = vpow.pop %v345
  %v347 = vmul.f32 %v318, 1.442695
  %v348 = vpow.pop %v347
  %v349 = vmul.f32 %v319, 1.442695
  %v350 = vpow.pop %v349
  %v351 = vmul.f32 %v320, 1.442695
  %v352 = vpow.pop %v351
  %v353 = vadd.f32 %v322, 1.0
  %v354 = vadd.f32 %v324, 1.0
  %v355 = vadd.f32 %v326, 1.0
  %v356 = vadd.f32 %v328, 1.0
  %v357 = vadd.f32 %v330, 1.0
  %v358 = vadd.f32 %v332, 1.0
  %v359 = vadd.f32 %v334, 1.0
  %v360 = vadd.f32 %v336, 1.0
  %v361 = vadd.f32 %v338, 1.0
  %v362 = vadd.f32 %v340, 1.0
  %v363 = vadd.f32 %v342, 1.0
  %v364 = vadd.f32 %v344, 1.0
  %v365 = vadd.f32 %v346, 1.0
  %v366 = vadd.f32 %v348, 1.0
  %v367 = vadd.f32 %v350, 1.0
  %v368 = vadd.f32 %v352, 1.0
  %v369 = vrcp.pop %v353
  %v370 = vmul.f32 1.0, %v369
  %v371 = vrcp.pop %v354
  %v372 = vmul.f32 1.0, %v371
  %v373 = vrcp.pop %v355
  %v374 = vmul.f32 1.0, %v373
  %v375 = vrcp.pop %v356
  %v376 = vmul.f32 1.0, %v375
  %v377 = vrcp.pop %v357
  %v378 = vmul.f32 1.0, %v377
  %v379 = vrcp.pop %v358
  %v380 = vmul.f32 1.0, %v379
  %v381 = vrcp.pop %v359
  %v382 = vmul.f32 1.0, %v381
  %v383 = vrcp.pop %v360
  %v384 = vmul.f32 1.0, %v383
  %v385 = vrcp.pop %v361
  %v386 = vmul.f32 1.0, %v385
  %v387 = vrcp.pop %v362
  %v388 = vmul.f32 1.0, %v387
  %v389 = vrcp.pop %v363
  %v390 = vmul.f32 1.0, %v389
  %v391 = vrcp.pop %v364
  %v392 = vmul.f32 1.0, %v391
  %v393 = vrcp.pop %v365
  %v394 = vmul.f32 1.0, %v393
  %v395 = vrcp.pop %v366
  %v396 = vmul.f32 1.0, %v395
  %v397 = vrcp.pop %v367
  %v398 = vmul.f32 1.0, %v397
  %v399 = vrcp.pop %v368
  %v400 = vmul.f32 1.0, %v399
  %402 = vset.pattern.permute.xlu0 0
  %403 = vperm.xlu0 %402, %v370
  %v404 = vpop.permute.xlu0 %403
  %407 = vset.pattern.permute.xlu0 0
  %408 = vperm.xlu0 %407, %v372
  %v409 = vpop.permute.xlu0 %408
  %412 = vset.pattern.permute.xlu0 0
  %413 = vperm.xlu0 %412, %v374
  %v414 = vpop.permute.xlu0 %413
  %417 = vset.pattern.permute.xlu0 0
  %418 = vperm.xlu0 %417, %v376
  %v419 = vpop.permute.xlu0 %418
  %422 = vset.pattern.permute.xlu0 0
  %423 = vperm.xlu0 %422, %v378
  %v424 = vpop.permute.xlu0 %423
  %427 = vset.pattern.permute.xlu0 0
  %428 = vperm.xlu0 %427, %v380
  %v429 = vpop.permute.xlu0 %428
  %432 = vset.pattern.permute.xlu0 0
  %433 = vperm.xlu0 %432, %v382
  %v434 = vpop.permute.xlu0 %433
  %437 = vset.pattern.permute.xlu0 0
  %438 = vperm.xlu0 %437, %v384
  %v439 = vpop.permute.xlu0 %438
  %442 = vset.pattern.permute.xlu0 0
  %443 = vperm.xlu0 %442, %v386
  %v444 = vpop.permute.xlu0 %443
  %447 = vset.pattern.permute.xlu0 0
  %448 = vperm.xlu0 %447, %v388
  %v449 = vpop.permute.xlu0 %448
  %452 = vset.pattern.permute.xlu0 0
  %453 = vperm.xlu0 %452, %v390
  %v454 = vpop.permute.xlu0 %453
  %457 = vset.pattern.permute.xlu0 0
  %458 = vperm.xlu0 %457, %v392
  %v459 = vpop.permute.xlu0 %458
  %462 = vset.pattern.permute.xlu0 0
  %463 = vperm.xlu0 %462, %v394
  %v464 = vpop.permute.xlu0 %463
  %467 = vset.pattern.permute.xlu0 0
  %468 = vperm.xlu0 %467, %v396
  %v469 = vpop.permute.xlu0 %468
  %472 = vset.pattern.permute.xlu0 0
  %473 = vperm.xlu0 %472, %v398
  %v474 = vpop.permute.xlu0 %473
  %477 = vset.pattern.permute.xlu0 0
  %478 = vperm.xlu0 %477, %v400
  %v479 = vpop.permute.xlu0 %478
  %v481 = vmul.f32 %v69, %v404
  %v482 = vmul.f32 %v70, %v404
  %v483 = vmul.f32 %v71, %v409
  %v484 = vmul.f32 %v72, %v409
  %v485 = vmul.f32 %v73, %v414
  %v486 = vmul.f32 %v74, %v414
  %v487 = vmul.f32 %v75, %v419
  %v488 = vmul.f32 %v76, %v419
  %v489 = vmul.f32 %v77, %v424
  %v490 = vmul.f32 %v78, %v424
  %v491 = vmul.f32 %v79, %v429
  %v492 = vmul.f32 %v80, %v429
  %v493 = vmul.f32 %v81, %v434
  %v494 = vmul.f32 %v82, %v434
  %v495 = vmul.f32 %v83, %v439
  %v496 = vmul.f32 %v84, %v439
  %v497 = vmul.f32 %v85, %v444
  %v498 = vmul.f32 %v86, %v444
  %v499 = vmul.f32 %v87, %v449
  %v500 = vmul.f32 %v88, %v449
  %v501 = vmul.f32 %v89, %v454
  %v502 = vmul.f32 %v90, %v454
  %v503 = vmul.f32 %v91, %v459
  %v504 = vmul.f32 %v92, %v459
  %v505 = vmul.f32 %v93, %v464
  %v506 = vmul.f32 %v94, %v464
  %v507 = vmul.f32 %v95, %v469
  %v508 = vmul.f32 %v96, %v469
  %v509 = vmul.f32 %v97, %v474
  %v510 = vmul.f32 %v98, %v474
  %v511 = vmul.f32 %v99, %v479
  %v512 = vmul.f32 %v100, %v479
  %513 = vst [vmem:[%s5] sm:$0xff] %v481
  %514 = vst [vmem:[%s5 + $0x8] sm:$0xff] %v482
  %515 = vst [vmem:[%s5 + $0x10] sm:$0xff] %v483
  %516 = vst [vmem:[%s5 + $0x18] sm:$0xff] %v484
  %517 = vst [vmem:[%s5 + $0x20] sm:$0xff] %v485
  %518 = vst [vmem:[%s5 + $0x28] sm:$0xff] %v486
  %519 = vst [vmem:[%s5 + $0x30] sm:$0xff] %v487
  %520 = vst [vmem:[%s5 + $0x38] sm:$0xff] %v488
  %521 = vst [vmem:[%s5 + $0x40] sm:$0xff] %v489
  %522 = vst [vmem:[%s5 + $0x48] sm:$0xff] %v490
  %523 = vst [vmem:[%s5 + $0x50] sm:$0xff] %v491
  %524 = vst [vmem:[%s5 + $0x58] sm:$0xff] %v492
  %525 = vst [vmem:[%s5 + $0x60] sm:$0xff] %v493
  %526 = vst [vmem:[%s5 + $0x68] sm:$0xff] %v494
  %527 = vst [vmem:[%s5 + $0x70] sm:$0xff] %v495
  %528 = vst [vmem:[%s5 + $0x78] sm:$0xff] %v496
  %529 = vst [vmem:[%s5 + $0x80] sm:$0xff] %v497
  %530 = vst [vmem:[%s5 + $0x88] sm:$0xff] %v498
  %531 = vst [vmem:[%s5 + $0x90] sm:$0xff] %v499
  %532 = vst [vmem:[%s5 + $0x98] sm:$0xff] %v500
  %533 = vst [vmem:[%s5 + $0xa0] sm:$0xff] %v501
  %534 = vst [vmem:[%s5 + $0xa8] sm:$0xff] %v502
  %535 = vst [vmem:[%s5 + $0xb0] sm:$0xff] %v503
  %536 = vst [vmem:[%s5 + $0xb8] sm:$0xff] %v504
  %537 = vst [vmem:[%s5 + $0xc0] sm:$0xff] %v505
  %538 = vst [vmem:[%s5 + $0xc8] sm:$0xff] %v506
  %539 = vst [vmem:[%s5 + $0xd0] sm:$0xff] %v507
  %540 = vst [vmem:[%s5 + $0xd8] sm:$0xff] %v508
  %541 = vst [vmem:[%s5 + $0xe0] sm:$0xff] %v509
  %542 = vst [vmem:[%s5 + $0xe8] sm:$0xff] %v510
  %543 = vst [vmem:[%s5 + $0xf0] sm:$0xff] %v511
  %544 = vst [vmem:[%s5 + $0xf8] sm:$0xff] %v512
  %s545 = scalar_lea.vmem %s0, 256
  %v546 = vld [vmem:[%s545] sm:$0xff]
  %v547 = vld [vmem:[%s545 + $0x8] sm:$0xff]
  %v548 = vld [vmem:[%s545 + $0x10] sm:$0xff]
  %v549 = vld [vmem:[%s545 + $0x18] sm:$0xff]
  %v550 = vld [vmem:[%s545 + $0x20] sm:$0xff]
  %v551 = vld [vmem:[%s545 + $0x28] sm:$0xff]
  %v552 = vld [vmem:[%s545 + $0x30] sm:$0xff]
  %v553 = vld [vmem:[%s545 + $0x38] sm:$0xff]
  %v554 = vld [vmem:[%s545 + $0x40] sm:$0xff]
  %v555 = vld [vmem:[%s545 + $0x48] sm:$0xff]
  %v556 = vld [vmem:[%s545 + $0x50] sm:$0xff]
  %v557 = vld [vmem:[%s545 + $0x58] sm:$0xff]
  %v558 = vld [vmem:[%s545 + $0x60] sm:$0xff]
  %v559 = vld [vmem:[%s545 + $0x68] sm:$0xff]
  %v560 = vld [vmem:[%s545 + $0x70] sm:$0xff]
  %v561 = vld [vmem:[%s545 + $0x78] sm:$0xff]
  %v562 = vld [vmem:[%s545 + $0x80] sm:$0xff]
  %v563 = vld [vmem:[%s545 + $0x88] sm:$0xff]
  %v564 = vld [vmem:[%s545 + $0x90] sm:$0xff]
  %v565 = vld [vmem:[%s545 + $0x98] sm:$0xff]
  %v566 = vld [vmem:[%s545 + $0xa0] sm:$0xff]
  %v567 = vld [vmem:[%s545 + $0xa8] sm:$0xff]
  %v568 = vld [vmem:[%s545 + $0xb0] sm:$0xff]
  %v569 = vld [vmem:[%s545 + $0xb8] sm:$0xff]
  %v570 = vld [vmem:[%s545 + $0xc0] sm:$0xff]
  %v571 = vld [vmem:[%s545 + $0xc8] sm:$0xff]
  %v572 = vld [vmem:[%s545 + $0xd0] sm:$0xff]
  %v573 = vld [vmem:[%s545 + $0xd8] sm:$0xff]
  %v574 = vld [vmem:[%s545 + $0xe0] sm:$0xff]
  %v575 = vld [vmem:[%s545 + $0xe8] sm:$0xff]
  %v576 = vld [vmem:[%s545 + $0xf0] sm:$0xff]
  %v577 = vld [vmem:[%s545 + $0xf8] sm:$0xff]
  %v578 = vadd.f32 %v546, %v547
  %579 = vadd.xlane.f32.xlu0 %v578
  %v580 = vpop.xlane.xlu0 %579
  %v581 = vadd.f32 %v548, %v549
  %582 = vadd.xlane.f32.xlu0 %v581
  %v583 = vpop.xlane.xlu0 %582
  %v584 = vadd.f32 %v550, %v551
  %585 = vadd.xlane.f32.xlu0 %v584
  %v586 = vpop.xlane.xlu0 %585
  %v587 = vadd.f32 %v552, %v553
  %588 = vadd.xlane.f32.xlu0 %v587
  %v589 = vpop.xlane.xlu0 %588
  %v590 = vadd.f32 %v554, %v555
  %591 = vadd.xlane.f32.xlu0 %v590
  %v592 = vpop.xlane.xlu0 %591
  %v593 = vadd.f32 %v556, %v557
  %594 = vadd.xlane.f32.xlu0 %v593
  %v595 = vpop.xlane.xlu0 %594
  %v596 = vadd.f32 %v558, %v559
  %597 = vadd.xlane.f32.xlu0 %v596
  %v598 = vpop.xlane.xlu0 %597
  %v599 = vadd.f32 %v560, %v561
  %600 = vadd.xlane.f32.xlu0 %v599
  %v601 = vpop.xlane.xlu0 %600
  %v602 = vadd.f32 %v562, %v563
  %603 = vadd.xlane.f32.xlu0 %v602
  %v604 = vpop.xlane.xlu0 %603
  %v605 = vadd.f32 %v564, %v565
  %606 = vadd.xlane.f32.xlu0 %v605
  %v607 = vpop.xlane.xlu0 %606
  %v608 = vadd.f32 %v566, %v567
  %609 = vadd.xlane.f32.xlu0 %v608
  %v610 = vpop.xlane.xlu0 %609
  %v611 = vadd.f32 %v568, %v569
  %612 = vadd.xlane.f32.xlu0 %v611
  %v613 = vpop.xlane.xlu0 %612
  %v614 = vadd.f32 %v570, %v571
  %615 = vadd.xlane.f32.xlu0 %v614
  %v616 = vpop.xlane.xlu0 %615
  %v617 = vadd.f32 %v572, %v573
  %618 = vadd.xlane.f32.xlu0 %v617
  %v619 = vpop.xlane.xlu0 %618
  %v620 = vadd.f32 %v574, %v575
  %621 = vadd.xlane.f32.xlu0 %v620
  %v622 = vpop.xlane.xlu0 %621
  %v623 = vadd.f32 %v576, %v577
  %624 = vadd.xlane.f32.xlu0 %v623
  %v625 = vpop.xlane.xlu0 %624
  %v626 = vmul.f32 %v580, 0.00390625
  %v627 = vmul.f32 %v583, 0.00390625
  %v628 = vmul.f32 %v586, 0.00390625
  %v629 = vmul.f32 %v589, 0.00390625
  %v630 = vmul.f32 %v592, 0.00390625
  %v631 = vmul.f32 %v595, 0.00390625
  %v632 = vmul.f32 %v598, 0.00390625
  %v633 = vmul.f32 %v601, 0.00390625
  %v634 = vmul.f32 %v604, 0.00390625
  %v635 = vmul.f32 %v607, 0.00390625
  %v636 = vmul.f32 %v610, 0.00390625
  %v637 = vmul.f32 %v613, 0.00390625
  %v638 = vmul.f32 %v616, 0.00390625
  %v639 = vmul.f32 %v619, 0.00390625
  %v640 = vmul.f32 %v622, 0.00390625
  %v641 = vmul.f32 %v625, 0.00390625
  %v642 = vmul.f32 %v20, %v626
  %v643 = vmul.f32 %v21, %v627
  %v644 = vmul.f32 %v22, %v628
  %v645 = vmul.f32 %v23, %v629
  %v646 = vmul.f32 %v24, %v630
  %v647 = vmul.f32 %v25, %v631
  %v648 = vmul.f32 %v26, %v632
  %v649 = vmul.f32 %v27, %v633
  %v650 = vmul.f32 %v28, %v634
  %v651 = vmul.f32 %v29, %v635
  %v652 = vmul.f32 %v30, %v636
  %v653 = vmul.f32 %v31, %v637
  %v654 = vmul.f32 %v32, %v638
  %v655 = vmul.f32 %v33, %v639
  %v656 = vmul.f32 %v34, %v640
  %v657 = vmul.f32 %v35, %v641
  %v658 = vsel %vm181, %v642, 0.0
  %v659 = vsel %vm181, %v643, 0.0
  %v660 = vadd.f32 %v658, %v659
  %v661 = vsel %vm181, %v644, 0.0
  %v662 = vadd.f32 %v660, %v661
  %v663 = vsel %vm181, %v645, 0.0
  %v664 = vadd.f32 %v662, %v663
  %v665 = vsel %vm181, %v646, 0.0
  %v666 = vadd.f32 %v664, %v665
  %v667 = vsel %vm181, %v647, 0.0
  %v668 = vadd.f32 %v666, %v667
  %v669 = vsel %vm181, %v648, 0.0
  %v670 = vadd.f32 %v668, %v669
  %v671 = vsel %vm181, %v649, 0.0
  %v672 = vadd.f32 %v670, %v671
  %v673 = vsel %vm181, %v650, 0.0
  %v674 = vadd.f32 %v672, %v673
  %v675 = vsel %vm181, %v651, 0.0
  %v676 = vadd.f32 %v674, %v675
  %v677 = vsel %vm181, %v652, 0.0
  %v678 = vadd.f32 %v676, %v677
  %v679 = vsel %vm181, %v653, 0.0
  %v680 = vadd.f32 %v678, %v679
  %v681 = vsel %vm181, %v654, 0.0
  %v682 = vadd.f32 %v680, %v681
  %v683 = vsel %vm181, %v655, 0.0
  %v684 = vadd.f32 %v682, %v683
  %v685 = vsel %vm181, %v656, 0.0
  %v686 = vadd.f32 %v684, %v685
  %v687 = vsel %vm181, %v657, 0.0
  %v688 = vadd.f32 %v686, %v687
  %v689 = vrot.slane %v688, 4
  %v690 = vadd.f32 %v688, %v689
  %v691 = vrot.slane %v690, 2
  %v692 = vadd.f32 %v690, %v691
  %v693 = vrot.slane %v692, 1
  %v694 = vadd.f32 %v692, %v693
  %v695 = vadd.f32 %v694, %v52
  %v696 = vmax.f32 %v695, 0.0
  %v697 = vlaneseq
  %v698 = vshrl.u32 %v697, 7
  %v699 = vsub.s32 0, %v698
  %v700 = vrot.slane %v696, %v699
  %v701 = vmul.f32 %v36, %v700
  %v702 = vmul.f32 %v37, %v700
  %v703 = vmul.f32 %v38, %v700
  %v704 = vmul.f32 %v39, %v700
  %v705 = vmul.f32 %v40, %v700
  %v706 = vmul.f32 %v41, %v700
  %v707 = vmul.f32 %v42, %v700
  %v708 = vmul.f32 %v43, %v700
  %v709 = vmul.f32 %v44, %v700
  %v710 = vmul.f32 %v45, %v700
  %v711 = vmul.f32 %v46, %v700
  %v712 = vmul.f32 %v47, %v700
  %v713 = vmul.f32 %v48, %v700
  %v714 = vmul.f32 %v49, %v700
  %v715 = vmul.f32 %v50, %v700
  %v716 = vmul.f32 %v51, %v700
  %v717 = vsel %vm181, %v701, 0.0
  %718 = vadd.xlane.f32.xlu0 %v717
  %v719 = vpop.xlane.xlu0 %718
  %v720 = vsel %vm181, %v702, 0.0
  %721 = vadd.xlane.f32.xlu0 %v720
  %v722 = vpop.xlane.xlu0 %721
  %v723 = vsel %vm181, %v703, 0.0
  %724 = vadd.xlane.f32.xlu0 %v723
  %v725 = vpop.xlane.xlu0 %724
  %v726 = vsel %vm181, %v704, 0.0
  %727 = vadd.xlane.f32.xlu0 %v726
  %v728 = vpop.xlane.xlu0 %727
  %v729 = vsel %vm181, %v705, 0.0
  %730 = vadd.xlane.f32.xlu0 %v729
  %v731 = vpop.xlane.xlu0 %730
  %v732 = vsel %vm181, %v706, 0.0
  %733 = vadd.xlane.f32.xlu0 %v732
  %v734 = vpop.xlane.xlu0 %733
  %v735 = vsel %vm181, %v707, 0.0
  %736 = vadd.xlane.f32.xlu0 %v735
  %v737 = vpop.xlane.xlu0 %736
  %v738 = vsel %vm181, %v708, 0.0
  %739 = vadd.xlane.f32.xlu0 %v738
  %v740 = vpop.xlane.xlu0 %739
  %v741 = vsel %vm181, %v709, 0.0
  %742 = vadd.xlane.f32.xlu0 %v741
  %v743 = vpop.xlane.xlu0 %742
  %v744 = vsel %vm181, %v710, 0.0
  %745 = vadd.xlane.f32.xlu0 %v744
  %v746 = vpop.xlane.xlu0 %745
  %v747 = vsel %vm181, %v711, 0.0
  %748 = vadd.xlane.f32.xlu0 %v747
  %v749 = vpop.xlane.xlu0 %748
  %v750 = vsel %vm181, %v712, 0.0
  %751 = vadd.xlane.f32.xlu0 %v750
  %v752 = vpop.xlane.xlu0 %751
  %v753 = vsel %vm181, %v713, 0.0
  %754 = vadd.xlane.f32.xlu0 %v753
  %v755 = vpop.xlane.xlu0 %754
  %v756 = vsel %vm181, %v714, 0.0
  %757 = vadd.xlane.f32.xlu0 %v756
  %v758 = vpop.xlane.xlu0 %757
  %v759 = vsel %vm181, %v715, 0.0
  %760 = vadd.xlane.f32.xlu0 %v759
  %v761 = vpop.xlane.xlu0 %760
  %v762 = vsel %vm181, %v716, 0.0
  %763 = vadd.xlane.f32.xlu0 %v762
  %v764 = vpop.xlane.xlu0 %763
  %v765 = vadd.f32 %v719, %v53
  %v766 = vadd.f32 %v722, %v54
  %v767 = vadd.f32 %v725, %v55
  %v768 = vadd.f32 %v728, %v56
  %v769 = vadd.f32 %v731, %v57
  %v770 = vadd.f32 %v734, %v58
  %v771 = vadd.f32 %v737, %v59
  %v772 = vadd.f32 %v740, %v60
  %v773 = vadd.f32 %v743, %v61
  %v774 = vadd.f32 %v746, %v62
  %v775 = vadd.f32 %v749, %v63
  %v776 = vadd.f32 %v752, %v64
  %v777 = vadd.f32 %v755, %v65
  %v778 = vadd.f32 %v758, %v66
  %v779 = vadd.f32 %v761, %v67
  %v780 = vadd.f32 %v764, %v68
  %v781 = vxor.u32 %v765, 2147483648
  %v782 = vxor.u32 %v766, 2147483648
  %v783 = vxor.u32 %v767, 2147483648
  %v784 = vxor.u32 %v768, 2147483648
  %v785 = vxor.u32 %v769, 2147483648
  %v786 = vxor.u32 %v770, 2147483648
  %v787 = vxor.u32 %v771, 2147483648
  %v788 = vxor.u32 %v772, 2147483648
  %v789 = vxor.u32 %v773, 2147483648
  %v790 = vxor.u32 %v774, 2147483648
  %v791 = vxor.u32 %v775, 2147483648
  %v792 = vxor.u32 %v776, 2147483648
  %v793 = vxor.u32 %v777, 2147483648
  %v794 = vxor.u32 %v778, 2147483648
  %v795 = vxor.u32 %v779, 2147483648
  %v796 = vxor.u32 %v780, 2147483648
  %v797 = vmul.f32 %v781, 1.442695
  %v798 = vpow.pop %v797
  %v799 = vmul.f32 %v782, 1.442695
  %v800 = vpow.pop %v799
  %v801 = vmul.f32 %v783, 1.442695
  %v802 = vpow.pop %v801
  %v803 = vmul.f32 %v784, 1.442695
  %v804 = vpow.pop %v803
  %v805 = vmul.f32 %v785, 1.442695
  %v806 = vpow.pop %v805
  %v807 = vmul.f32 %v786, 1.442695
  %v808 = vpow.pop %v807
  %v809 = vmul.f32 %v787, 1.442695
  %v810 = vpow.pop %v809
  %v811 = vmul.f32 %v788, 1.442695
  %v812 = vpow.pop %v811
  %v813 = vmul.f32 %v789, 1.442695
  %v814 = vpow.pop %v813
  %v815 = vmul.f32 %v790, 1.442695
  %v816 = vpow.pop %v815
  %v817 = vmul.f32 %v791, 1.442695
  %v818 = vpow.pop %v817
  %v819 = vmul.f32 %v792, 1.442695
  %v820 = vpow.pop %v819
  %v821 = vmul.f32 %v793, 1.442695
  %v822 = vpow.pop %v821
  %v823 = vmul.f32 %v794, 1.442695
  %v824 = vpow.pop %v823
  %v825 = vmul.f32 %v795, 1.442695
  %v826 = vpow.pop %v825
  %v827 = vmul.f32 %v796, 1.442695
  %v828 = vpow.pop %v827
  %v829 = vadd.f32 %v798, 1.0
  %v830 = vadd.f32 %v800, 1.0
  %v831 = vadd.f32 %v802, 1.0
  %v832 = vadd.f32 %v804, 1.0
  %v833 = vadd.f32 %v806, 1.0
  %v834 = vadd.f32 %v808, 1.0
  %v835 = vadd.f32 %v810, 1.0
  %v836 = vadd.f32 %v812, 1.0
  %v837 = vadd.f32 %v814, 1.0
  %v838 = vadd.f32 %v816, 1.0
  %v839 = vadd.f32 %v818, 1.0
  %v840 = vadd.f32 %v820, 1.0
  %v841 = vadd.f32 %v822, 1.0
  %v842 = vadd.f32 %v824, 1.0
  %v843 = vadd.f32 %v826, 1.0
  %v844 = vadd.f32 %v828, 1.0
  %v845 = vrcp.pop %v829
  %v846 = vmul.f32 1.0, %v845
  %v847 = vrcp.pop %v830
  %v848 = vmul.f32 1.0, %v847
  %v849 = vrcp.pop %v831
  %v850 = vmul.f32 1.0, %v849
  %v851 = vrcp.pop %v832
  %v852 = vmul.f32 1.0, %v851
  %v853 = vrcp.pop %v833
  %v854 = vmul.f32 1.0, %v853
  %v855 = vrcp.pop %v834
  %v856 = vmul.f32 1.0, %v855
  %v857 = vrcp.pop %v835
  %v858 = vmul.f32 1.0, %v857
  %v859 = vrcp.pop %v836
  %v860 = vmul.f32 1.0, %v859
  %v861 = vrcp.pop %v837
  %v862 = vmul.f32 1.0, %v861
  %v863 = vrcp.pop %v838
  %v864 = vmul.f32 1.0, %v863
  %v865 = vrcp.pop %v839
  %v866 = vmul.f32 1.0, %v865
  %v867 = vrcp.pop %v840
  %v868 = vmul.f32 1.0, %v867
  %v869 = vrcp.pop %v841
  %v870 = vmul.f32 1.0, %v869
  %v871 = vrcp.pop %v842
  %v872 = vmul.f32 1.0, %v871
  %v873 = vrcp.pop %v843
  %v874 = vmul.f32 1.0, %v873
  %v875 = vrcp.pop %v844
  %v876 = vmul.f32 1.0, %v875
  %878 = vset.pattern.permute.xlu0 0
  %879 = vperm.xlu0 %878, %v846
  %v880 = vpop.permute.xlu0 %879
  %883 = vset.pattern.permute.xlu0 0
  %884 = vperm.xlu0 %883, %v848
  %v885 = vpop.permute.xlu0 %884
  %888 = vset.pattern.permute.xlu0 0
  %889 = vperm.xlu0 %888, %v850
  %v890 = vpop.permute.xlu0 %889
  %893 = vset.pattern.permute.xlu0 0
  %894 = vperm.xlu0 %893, %v852
  %v895 = vpop.permute.xlu0 %894
  %898 = vset.pattern.permute.xlu0 0
  %899 = vperm.xlu0 %898, %v854
  %v900 = vpop.permute.xlu0 %899
  %903 = vset.pattern.permute.xlu0 0
  %904 = vperm.xlu0 %903, %v856
  %v905 = vpop.permute.xlu0 %904
  %908 = vset.pattern.permute.xlu0 0
  %909 = vperm.xlu0 %908, %v858
  %v910 = vpop.permute.xlu0 %909
  %913 = vset.pattern.permute.xlu0 0
  %914 = vperm.xlu0 %913, %v860
  %v915 = vpop.permute.xlu0 %914
  %918 = vset.pattern.permute.xlu0 0
  %919 = vperm.xlu0 %918, %v862
  %v920 = vpop.permute.xlu0 %919
  %923 = vset.pattern.permute.xlu0 0
  %924 = vperm.xlu0 %923, %v864
  %v925 = vpop.permute.xlu0 %924
  %928 = vset.pattern.permute.xlu0 0
  %929 = vperm.xlu0 %928, %v866
  %v930 = vpop.permute.xlu0 %929
  %933 = vset.pattern.permute.xlu0 0
  %934 = vperm.xlu0 %933, %v868
  %v935 = vpop.permute.xlu0 %934
  %938 = vset.pattern.permute.xlu0 0
  %939 = vperm.xlu0 %938, %v870
  %v940 = vpop.permute.xlu0 %939
  %943 = vset.pattern.permute.xlu0 0
  %944 = vperm.xlu0 %943, %v872
  %v945 = vpop.permute.xlu0 %944
  %948 = vset.pattern.permute.xlu0 0
  %949 = vperm.xlu0 %948, %v874
  %v950 = vpop.permute.xlu0 %949
  %953 = vset.pattern.permute.xlu0 0
  %954 = vperm.xlu0 %953, %v876
  %v955 = vpop.permute.xlu0 %954
  %v957 = vmul.f32 %v546, %v880
  %v958 = vmul.f32 %v547, %v880
  %v959 = vmul.f32 %v548, %v885
  %v960 = vmul.f32 %v549, %v885
  %v961 = vmul.f32 %v550, %v890
  %v962 = vmul.f32 %v551, %v890
  %v963 = vmul.f32 %v552, %v895
  %v964 = vmul.f32 %v553, %v895
  %v965 = vmul.f32 %v554, %v900
  %v966 = vmul.f32 %v555, %v900
  %v967 = vmul.f32 %v556, %v905
  %v968 = vmul.f32 %v557, %v905
  %v969 = vmul.f32 %v558, %v910
  %v970 = vmul.f32 %v559, %v910
  %v971 = vmul.f32 %v560, %v915
  %v972 = vmul.f32 %v561, %v915
  %v973 = vmul.f32 %v562, %v920
  %v974 = vmul.f32 %v563, %v920
  %v975 = vmul.f32 %v564, %v925
  %v976 = vmul.f32 %v565, %v925
  %v977 = vmul.f32 %v566, %v930
  %v978 = vmul.f32 %v567, %v930
  %v979 = vmul.f32 %v568, %v935
  %v980 = vmul.f32 %v569, %v935
  %v981 = vmul.f32 %v570, %v940
  %v982 = vmul.f32 %v571, %v940
  %v983 = vmul.f32 %v572, %v945
  %v984 = vmul.f32 %v573, %v945
  %v985 = vmul.f32 %v574, %v950
  %v986 = vmul.f32 %v575, %v950
  %v987 = vmul.f32 %v576, %v955
  %v988 = vmul.f32 %v577, %v955
  %s989 = scalar_lea.vmem %s5, 256
  %990 = vst [vmem:[%s989] sm:$0xff] %v957
  %991 = vst [vmem:[%s989 + $0x8] sm:$0xff] %v958
  %992 = vst [vmem:[%s989 + $0x10] sm:$0xff] %v959
  %993 = vst [vmem:[%s989 + $0x18] sm:$0xff] %v960
  %994 = vst [vmem:[%s989 + $0x20] sm:$0xff] %v961
  %995 = vst [vmem:[%s989 + $0x28] sm:$0xff] %v962
  %996 = vst [vmem:[%s989 + $0x30] sm:$0xff] %v963
  %997 = vst [vmem:[%s989 + $0x38] sm:$0xff] %v964
  %998 = vst [vmem:[%s989 + $0x40] sm:$0xff] %v965
  %999 = vst [vmem:[%s989 + $0x48] sm:$0xff] %v966
  %1000 = vst [vmem:[%s989 + $0x50] sm:$0xff] %v967
  %1001 = vst [vmem:[%s989 + $0x58] sm:$0xff] %v968
  %1002 = vst [vmem:[%s989 + $0x60] sm:$0xff] %v969
  %1003 = vst [vmem:[%s989 + $0x68] sm:$0xff] %v970
  %1004 = vst [vmem:[%s989 + $0x70] sm:$0xff] %v971
  %1005 = vst [vmem:[%s989 + $0x78] sm:$0xff] %v972
  %1006 = vst [vmem:[%s989 + $0x80] sm:$0xff] %v973
  %1007 = vst [vmem:[%s989 + $0x88] sm:$0xff] %v974
  %1008 = vst [vmem:[%s989 + $0x90] sm:$0xff] %v975
  %1009 = vst [vmem:[%s989 + $0x98] sm:$0xff] %v976
  %1010 = vst [vmem:[%s989 + $0xa0] sm:$0xff] %v977
  %1011 = vst [vmem:[%s989 + $0xa8] sm:$0xff] %v978
  %1012 = vst [vmem:[%s989 + $0xb0] sm:$0xff] %v979
  %1013 = vst [vmem:[%s989 + $0xb8] sm:$0xff] %v980
  %1014 = vst [vmem:[%s989 + $0xc0] sm:$0xff] %v981
  %1015 = vst [vmem:[%s989 + $0xc8] sm:$0xff] %v982
  %1016 = vst [vmem:[%s989 + $0xd0] sm:$0xff] %v983
  %1017 = vst [vmem:[%s989 + $0xd8] sm:$0xff] %v984
  %1018 = vst [vmem:[%s989 + $0xe0] sm:$0xff] %v985
  %1019 = vst [vmem:[%s989 + $0xe8] sm:$0xff] %v986
  %1020 = vst [vmem:[%s989 + $0xf0] sm:$0xff] %v987
  %1021 = vst [vmem:[%s989 + $0xf8] sm:$0xff] %v988
  // Predicated region
  $region22: #{attention_layer.1} parent=0 // pred_check
    _
  $region23: #{attention_layer.1} parent=0 // pred_check_branch
    %1023 = sbr.rel (0) target = $region25
  $region24: #{attention_layer.1} parent=0 // pred_region
    _
  $region25: #{attention_layer.1} parent=0 // pred_fallthru
    _
  // Predicated region
  $region26: #{attention_layer.1} parent=0 // pred_check
    _
  $region27: #{attention_layer.1} parent=0 // pred_check_branch
    %1025 = sbr.rel (0) target = $region29
  $region28: #{attention_layer.1} parent=0 // pred_region
    _
  $region29: #{attention_layer.1} parent=0 // pred_fallthru
    _

</llo_original>
